<compile_context>
chip_gen: v7x
topology: tpu7x:2x2x1
jax: 0.10.0
libtpu: 0.0.40
codegen_flags: <defaults>
</compile_context>

<pallas_src>
import functools

import jax
import jax.numpy as jnp
from jax.experimental import pallas as pl
from jax.experimental.pallas import tpu as pltpu


def _sdpa_kernel(q_ref, k_ref, v_ref, out_ref, attn_ref, *, inv_temperature):
    # Blocks: q (BT, TQ, Dk), k (BT, Lk, Dk), v (BT, Lk, Dv).
    q = q_ref[...] * jnp.asarray(inv_temperature, dtype=q_ref.dtype)

    # scores = (q / T) @ k^T — contract the last dims directly (no transpose).
    scores = jnp.einsum(
        "bqd,bkd->bqk", q, k_ref[...], preferred_element_type=jnp.float32
    )  # (BT, TQ, Lk) f32

    # Numerically-stable softmax along the last axis (== nn.Softmax(dim=2)).
    m = jnp.max(scores, axis=-1, keepdims=True)
    e = jnp.exp(scores - m)                          # (BT, TQ, Lk) f32
    denom = jnp.sum(e, axis=-1, keepdims=True)       # (BT, TQ, 1)  f32
    recip = 1.0 / denom                              # exact (matches torch divide)

    # PV consumes the unnormalized probabilities; normalize the (smaller)
    # (BT, TQ, Dv) result afterwards so no normalized f32 (TQ, Lk) slab is live.
    pv = jnp.einsum(
        "bqk,bkd->bqd",
        e.astype(v_ref.dtype),
        v_ref[...],
        preferred_element_type=jnp.float32,
    )
    out_ref[...] = (pv * recip).astype(out_ref.dtype)
    attn_ref[...] = (e * recip).astype(attn_ref.dtype)


def _divisors(n):
    ds = []
    i = 1
    while i * i <= n:
        if n % i == 0:
            ds.append(i)
            if i != n // i:
                ds.append(n // i)
        i += 1
    return sorted(ds)


def _vmem_budget():
    """Return (working-set budget, vmem_limit_bytes) sized per TPU generation."""
    try:
        cap = int(pltpu.get_tpu_info().vmem_capacity_bytes)
    except Exception:
        cap = 0
    if cap <= 0:
        cap = 64 << 20  # conservative fallback (v7x-sized VMEM)
    # ~96 MiB on v5e/v6e (128 MiB physical), ~48 MiB on v7x (64 MiB physical).
    vmem_limit = min(int(cap * 0.75), cap - (8 << 20))
    vmem_limit = max(vmem_limit, 16 << 20)
    budget = int(vmem_limit * 0.8)  # leave headroom for compiler-internal scratch
    return budget, vmem_limit


def _choose_tiles(B, Lq, Lk, Dk, Dv, itemsize, budget):
    """Pick (block_b, block_q) under the per-generation VMEM budget."""
    pack = max(8, 32 // itemsize)  # sublane pack: 8 f32, 16 bf16, 32 int8/fp8

    def step_bytes(bt, tq):
        # Double-buffered in/out blocks + f32 score/exp temporaries (scores, e,
        # broadcast/cast copy) + the f32 PV accumulator.
        io = 2 * (tq * Dk + Lk * Dk + Lk * Dv + tq * Dv + tq * Lk) * itemsize
        tmp = 3 * tq * Lk * 4 + tq * Lk * itemsize + tq * Dv * 4
        return bt * (io + tmp)

    # block_q: largest budget-fitting divisor of Lq, aligned 256 > 128 > pack.
    if Lq <= 256:
        block_q = Lq  # block == full array dim is always layout-legal
    else:
        divs = _divisors(Lq)
        block_q = None
        for align in (256, 128, pack):
            cands = [d for d in divs if d % align == 0 and step_bytes(1, d) <= budget]
            if cands:
                block_q = max(cands)
                break
        if block_q is None:
            block_q = Lq
    # Shrink if a single batch row still exceeds the budget and a clean split exists.
    while (
        step_bytes(1, block_q) > budget
        and block_q % 2 == 0
        and (block_q // 2) % pack == 0
        and Lq % (block_q // 2) == 0
    ):
        block_q //= 2

    # Small-sequence regime: pack batch elements so each step issues a
    # reasonably sized matmul, but keep >= 2 parallel grid steps (v7x = 2 TCs).
    block_b = 1
    if Lq <= 128 and Lk <= 1024 and B > 1:
        max_bb = B if (Lq // block_q) >= 2 else max(1, B // 2)
        for cand in range(min(max_bb, 64), 0, -1):
            if B % cand == 0 and step_bytes(cand, block_q) <= budget:
                block_b = cand
                break

    # Final guarantee of >= 2 parallel steps when the problem can be split.
    if (B // block_b) * (Lq // block_q) < 2:
        if B >= 2 and block_b > 1:
            for cand in range(block_b - 1, 0, -1):
                if B % cand == 0 and B // cand >= 2:
                    block_b = cand
                    break
        if (B // block_b) * (Lq // block_q) < 2:
            half = block_q // 2
            if half >= pack and half % pack == 0 and Lq % half == 0:
                block_q = half

    return block_b, block_q


def scaled_dot_product_attention(q, k, v, temperature):
    """q: (B, Lq, Dk), k: (B, Lk, Dk), v: (B, Lk, Dv) -> (output, attn)."""
    B, Lq, Dk = q.shape
    _, Lk, _ = k.shape
    Dv = v.shape[-1]
    itemsize = jnp.dtype(q.dtype).itemsize

    budget, vmem_limit = _vmem_budget()
    block_b, block_q = _choose_tiles(B, Lq, Lk, Dk, Dv, itemsize, budget)

    kernel = functools.partial(_sdpa_kernel, inv_temperature=1.0 / float(temperature))

    out_shapes = (
        jax.ShapeDtypeStruct((B, Lq, Dv), q.dtype),
        jax.ShapeDtypeStruct((B, Lq, Lk), q.dtype),
    )

    grid = (B // block_b, Lq // block_q)

    cost = pl.CostEstimate(
        flops=2 * B * Lq * Lk * (Dk + Dv),
        transcendentals=B * Lq * Lk,
        bytes_accessed=(q.size + k.size + v.size) * itemsize
        + (B * Lq * Dv + B * Lq * Lk) * itemsize,
    )

    return pl.pallas_call(
        kernel,
        out_shape=out_shapes,
        grid_spec=pltpu.PrefetchScalarGridSpec(
            num_scalar_prefetch=0,
            grid=grid,
            in_specs=[
                pl.BlockSpec((block_b, block_q, Dk), lambda b, i: (b, i, 0)),
                # k / v are resident across the Lq-tile axis (same block index
                # for every i); they are only re-fetched when b changes.
                pl.BlockSpec((block_b, Lk, Dk), lambda b, i: (b, 0, 0)),
                pl.BlockSpec((block_b, Lk, Dv), lambda b, i: (b, 0, 0)),
            ],
            out_specs=(
                pl.BlockSpec((block_b, block_q, Dv), lambda b, i: (b, i, 0)),
                pl.BlockSpec((block_b, block_q, Lk), lambda b, i: (b, i, 0)),
            ),
        ),
        compiler_params=pltpu.CompilerParams(
            dimension_semantics=("parallel", "parallel"),
            vmem_limit_bytes=vmem_limit,
        ),
        cost_estimate=cost,
    )(q, k, v)


if __name__ == "__main__":
    def _reference(q, k, v, temperature):
        scores = jnp.einsum("bqd,bkd->bqk", q, k) / temperature
        attn = jax.nn.softmax(scores, axis=2)
        out = jnp.einsum("bqk,bkd->bqd", attn, v)
        return out, attn

    key = jax.random.PRNGKey(0)

    # Small deterministic demo shapes matching the PyTorch bmm convention.
    B, Lq, Lk, Dk, Dv = 2, 8, 8, 32, 32
    temperature = float(Dk) ** 0.5
    kq, kk, kv, key = jax.random.split(key, 4)
    q = jax.random.normal(kq, (B, Lq, Dk), dtype=jnp.float32)
    k = jax.random.normal(kk, (B, Lk, Dk), dtype=jnp.float32)
    v = jax.random.normal(kv, (B, Lk, Dv), dtype=jnp.float32)

    output, attn = scaled_dot_product_attention(q, k, v, temperature)
    jax.block_until_ready((output, attn))
    out_ref, attn_ref = _reference(q, k, v, temperature)
    assert jnp.allclose(attn, attn_ref, atol=1e-3, rtol=1e-3)
    assert jnp.allclose(output, out_ref, atol=1e-3, rtol=1e-3)

    # Second shape that exercises the multi-step (batch-parallel) grid path with
    # larger, MXU-aligned Lq/Lk tiles.
    B2, Lq2, Lk2, Dk2, Dv2 = 2, 512, 128, 64, 64
    temperature2 = float(Dk2) ** 0.5
    kq, kk, kv, key = jax.random.split(key, 4)
    q2 = jax.random.normal(kq, (B2, Lq2, Dk2), dtype=jnp.float32)
    k2 = jax.random.normal(kk, (B2, Lk2, Dk2), dtype=jnp.float32)
    v2 = jax.random.normal(kv, (B2, Lk2, Dv2), dtype=jnp.float32)

    output2, attn2 = scaled_dot_product_attention(q2, k2, v2, temperature2)
    jax.block_until_ready((output2, attn2))
    out_ref2, attn_ref2 = _reference(q2, k2, v2, temperature2)
    assert jnp.allclose(attn2, attn_ref2, atol=1e-3, rtol=1e-3)
    assert jnp.allclose(output2, out_ref2, atol=1e-3, rtol=1e-3)

    print("KERNEL_OK")
</pallas_src>

<mosaic_0001>
module attributes {stable_mosaic.version = 11 : i64} {
  func.func @_sdpa_kernel(%arg0: i32, %arg1: i32, %arg2: memref<1x8x32xf32, #tpu.memory_space<vmem>>, %arg3: memref<1x8x32xf32, #tpu.memory_space<vmem>>, %arg4: memref<1x8x32xf32, #tpu.memory_space<vmem>>, %arg5: memref<1x8x32xf32, #tpu.memory_space<vmem>>, %arg6: memref<1x8x8xf32, #tpu.memory_space<vmem>>) attributes {dimension_semantics = [#tpu.dimension_semantics<parallel>, #tpu.dimension_semantics<parallel>], iteration_bounds = array<i64: 2, 1>, scalar_prefetch = 0 : i64, scratch_operands = 0 : i64, tpu.core_type = #tpu.core_type<tc>, window_params = [{transform_indices = @transform_0, window_bounds = array<i64: 1, 8, 32>}, {transform_indices = @transform_1, window_bounds = array<i64: 1, 8, 32>}, {transform_indices = @transform_2, window_bounds = array<i64: 1, 8, 32>}, {transform_indices = @transform_3, window_bounds = array<i64: 1, 8, 32>}, {transform_indices = @transform_4, window_bounds = array<i64: 1, 8, 8>}]} {
    %c0 = arith.constant 0 : index
    %c0_0 = arith.constant 0 : index
    %c0_1 = arith.constant 0 : index
    %0 = vector.load %arg2[%c0, %c0_0, %c0_1] : memref<1x8x32xf32, #tpu.memory_space<vmem>>, vector<1x8x32xf32>
    %cst = arith.constant 0.176776692 : f32
    %1 = vector.broadcast %cst : f32 to vector<1x8x32xf32>
    %2 = arith.mulf %0, %1 : vector<1x8x32xf32>
    %c0_2 = arith.constant 0 : index
    %c0_3 = arith.constant 0 : index
    %c0_4 = arith.constant 0 : index
    %3 = vector.load %arg3[%c0_2, %c0_3, %c0_4] : memref<1x8x32xf32, #tpu.memory_space<vmem>>, vector<1x8x32xf32>
    "tpu.trace_start"() <{level = 10 : i32, message = "bqd,bkd->bqk"}> : () -> ()
    %cst_5 = arith.constant dense<0.000000e+00> : vector<1x8x8xf32>
    %4 = tpu.matmul %2, %3, %cst_5 {dimension_numbers = #tpu.dot_dimension_numbers<[2], [2], [1], [1], [0, 0, 0, 1, 1, 1], [0], [0]>} : vector<1x8x32xf32>, vector<1x8x32xf32>, vector<1x8x8xf32> -> vector<1x8x8xf32>
    "tpu.trace_stop"() : () -> ()
    %cst_6 = arith.constant dense<0xFF800000> : vector<1x8xf32>
    %5 = vector.multi_reduction <maximumf>, %4, %cst_6 [2] : vector<1x8x8xf32> to vector<1x8xf32>
    %6 = vector.shape_cast %5 : vector<1x8xf32> to vector<1x8x1xf32>
    %7 = vector.broadcast %6 : vector<1x8x1xf32> to vector<1x8x8xf32>
    %8 = arith.subf %4, %7 : vector<1x8x8xf32>
    %9 = math.exp %8 : vector<1x8x8xf32>
    %cst_7 = arith.constant dense<0.000000e+00> : vector<1x8xf32>
    %10 = vector.multi_reduction <add>, %9, %cst_7 [2] : vector<1x8x8xf32> to vector<1x8xf32>
    %11 = vector.shape_cast %10 : vector<1x8xf32> to vector<1x8x1xf32>
    %cst_8 = arith.constant 1.000000e+00 : f32
    %12 = vector.broadcast %cst_8 : f32 to vector<1x8x1xf32>
    %13 = arith.divf %12, %11 : vector<1x8x1xf32>
    %c0_9 = arith.constant 0 : index
    %c0_10 = arith.constant 0 : index
    %c0_11 = arith.constant 0 : index
    %14 = vector.load %arg4[%c0_9, %c0_10, %c0_11] : memref<1x8x32xf32, #tpu.memory_space<vmem>>, vector<1x8x32xf32>
    "tpu.trace_start"() <{level = 10 : i32, message = "bqk,bkd->bqd"}> : () -> ()
    %cst_12 = arith.constant dense<0.000000e+00> : vector<1x8x32xf32>
    %15 = tpu.matmul %9, %14, %cst_12 {dimension_numbers = #tpu.dot_dimension_numbers<[2], [1], [1], [2], [0, 0, 0, 1, 1, 2], [0], [0]>} : vector<1x8x8xf32>, vector<1x8x32xf32>, vector<1x8x32xf32> -> vector<1x8x32xf32>
    "tpu.trace_stop"() : () -> ()
    %16 = vector.broadcast %13 : vector<1x8x1xf32> to vector<1x8x32xf32>
    %17 = arith.mulf %15, %16 : vector<1x8x32xf32>
    %c0_13 = arith.constant 0 : index
    %c0_14 = arith.constant 0 : index
    %c0_15 = arith.constant 0 : index
    %18 = vector.load %arg5[%c0_13, %c0_14, %c0_15] : memref<1x8x32xf32, #tpu.memory_space<vmem>>, vector<1x8x32xf32>
    tpu.vector_store %arg5[%c0_13, %c0_14, %c0_15], %17 {strides = array<i32>} : memref<1x8x32xf32, #tpu.memory_space<vmem>>, vector<1x8x32xf32>,
    %19 = vector.broadcast %13 : vector<1x8x1xf32> to vector<1x8x8xf32>
    %20 = arith.mulf %9, %19 : vector<1x8x8xf32>
    %c0_16 = arith.constant 0 : index
    %c0_17 = arith.constant 0 : index
    %c0_18 = arith.constant 0 : index
    %21 = vector.load %arg6[%c0_16, %c0_17, %c0_18] : memref<1x8x8xf32, #tpu.memory_space<vmem>>, vector<1x8x8xf32>
    tpu.vector_store %arg6[%c0_16, %c0_17, %c0_18], %20 {strides = array<i32>} : memref<1x8x8xf32, #tpu.memory_space<vmem>>, vector<1x8x8xf32>,
    return
  }
  func.func @transform_0(%arg0: i32, %arg1: i32) -> (i32, i32, i32) {
    %c0_i32 = arith.constant 0 : i32
    %c0_i32_0 = arith.constant 0 : i32
    return %arg0, %arg1, %c0_i32 : i32, i32, i32
  }
  func.func @transform_1(%arg0: i32, %arg1: i32) -> (i32, i32, i32) {
    %c0_i32 = arith.constant 0 : i32
    %c0_i32_0 = arith.constant 0 : i32
    %c0_i32_1 = arith.constant 0 : i32
    return %arg0, %c0_i32, %c0_i32_0 : i32, i32, i32
  }
  func.func @transform_2(%arg0: i32, %arg1: i32) -> (i32, i32, i32) {
    %c0_i32 = arith.constant 0 : i32
    %c0_i32_0 = arith.constant 0 : i32
    %c0_i32_1 = arith.constant 0 : i32
    return %arg0, %c0_i32, %c0_i32_0 : i32, i32, i32
  }
  func.func @transform_3(%arg0: i32, %arg1: i32) -> (i32, i32, i32) {
    %c0_i32 = arith.constant 0 : i32
    %c0_i32_0 = arith.constant 0 : i32
    return %arg0, %arg1, %c0_i32 : i32, i32, i32
  }
  func.func @transform_4(%arg0: i32, %arg1: i32) -> (i32, i32, i32) {
    %c0_i32 = arith.constant 0 : i32
    %c0_i32_0 = arith.constant 0 : i32
    return %arg0, %arg1, %c0_i32 : i32, i32, i32
  }
}

</mosaic_0001>

<llo_original>
// kernel: tpu_custom_call.1
$region0: #{tpu_custom_call.1}
  #allocation0 [shape = 'u32[]', space=smem, size = 0x4, offset = 0x4, fixed_abs, tag = 'smem constant byte address 0x4 - core index']
  #allocation1 [shape = 'u32[144,128]{1,0:T(1,128)}', space=vmem, size = 0x12000, scoped, tag = 'internal scratch']
  %s0 = inlined_call_operand.hbm [shape: f32[2,8,32], index: 0, kind: input, shape index: {}]
  %s1 = inlined_call_operand.hbm [shape: f32[2,8,32], index: 1, kind: input, shape index: {}]
  %s2 = inlined_call_operand.hbm [shape: f32[2,8,32], index: 2, kind: input, shape index: {}]
  %s3 = inlined_call_operand.hbm [shape: f32[2,8,32], index: 3, kind: output, shape index: {0}]
  %s4 = inlined_call_operand.hbm [shape: f32[2,8,8], index: 4, kind: output, shape index: {1}]
  %5 = xla_tuple %s3, %s4
  %s6 = sld [smem:[#allocation0]]
  $region65: #{tpu_custom_call.1} parent=0
    _
  %s8 = ssub.s32 1, %s6
  %s9 = scalar_select 0, %s8, %s6
  $region1: #{tpu_custom_call.1} parent=0
    #allocation2 [shape = 'u8[8192]{0}', space=vmem, size = 0x2000, scoped, tag = 'input window, operand 0']
    #allocation3 [shape = 's32[2]{0}', space=sflag, size = 0x8, scoped, tag = 'scoped memory for tpu_custom_call.1']
    #allocation4 [shape = 's32[2]{0}', space=sflag, size = 0x8, scoped, tag = 'scoped memory for tpu_custom_call.1']
    #allocation5 [shape = 'u8[8192]{0}', space=vmem, size = 0x2000, scoped, tag = 'input window, operand 1']
    #allocation6 [shape = 's32[2]{0}', space=sflag, size = 0x8, scoped, tag = 'scoped memory for tpu_custom_call.1']
    #allocation7 [shape = 'u8[8192]{0}', space=vmem, size = 0x2000, scoped, tag = 'input window, operand 2']
    #allocation8 [shape = 'u8[8192]{0}', space=vmem, size = 0x2000, scoped, tag = 'output window, operand 0']
    #allocation9 [shape = 'u8[8192]{0}', space=vmem, size = 0x2000, scoped, tag = 'output window, operand 1']
    #allocation10 [shape = 's32[2]{0}', space=sflag, size = 0x8, scoped, tag = 'scoped memory for tpu_custom_call.1']
    %10 = vsyncpa [#allocation3], 0
    %s11 = scalar_lea.sflag [#allocation3], 1
    %12 = vsyncpa %s11, 0
    %13 = vsyncpa [#allocation6], 0
    %s14 = scalar_lea.sflag [#allocation6], 1
    %15 = vsyncpa %s14, 0
    %16 = vsyncpa [#allocation4], 0
    %s17 = scalar_lea.sflag [#allocation4], 1
    %18 = vsyncpa %s17, 0
    %19 = vsyncpa [#allocation10], 0
    %s20 = scalar_lea.sflag [#allocation10], 1
    %21 = vsyncpa %s20, 0
    loop: start=0, step=1, limit=4
    $region2: #{tpu_custom_call.1} parent=1 // loop_pre_header
      _
    $region3: #{tpu_custom_call.1} parent=1 // loop_header
      %s23 = sphi 0, %s27
      %p24 = scmp.ge.s32.totalorder %s23, 4
      %s30 = sphi 0, %s42
      %s31 = sphi 0, %s38
      %s32 = sphi 0, %s30
      %s33 = sphi 0, %s31
      %s34 = sphi 0, %s32
      %s35 = sphi 0, %s33
      %s47 = sphi 0, %s49
      %s50 = sphi 0, %s47
      %s51 = sphi 0, %s50
      %s67 = sphi 0, %s51
      %s73 = sphi 0, %s75
      %s76 = sphi 0, %s73
      %s77 = sphi 0, %s76
      %s93 = sphi 0, %s77
      %s99 = sphi 0, %s101
      %s102 = sphi 0, %s99
      %s103 = sphi 0, %s102
      %s119 = sphi 0, %s103
      %s127 = sphi 0, %s129
      %s130 = sphi 0, %s127
      %s131 = sphi 0, %s130
      %s147 = sphi 0, %s131
      %s155 = sphi 0, %s157
      %s158 = sphi 0, %s155
      %s159 = sphi 0, %s158
      %s175 = sphi 0, %s159
    $region4: #{tpu_custom_call.1} parent=1 // loop_header_branch
      %26 = sbr.rel (%p24) target = $region8
    $region5: #{tpu_custom_call.1} parent=1 // loop_body
      %s28 = ssub.s32 %s23, 1
      %s29 = ssub.s32 %s23, 2
      %s36 = sadd.s32 1, %s31
      %p37 = scmp.ge.s32.totalorder %s36, 1
      %s38 = scalar_select %p37, 0, %s36
      %s39 = sadd.s32 1, %s30
      %s40 = scalar_select %p37, %s39, %s30
      %p41 = scmp.ge.s32.totalorder %s40, 2
      %s42 = scalar_select %p41, 0, %s40
      %s43 = ssub.s32 %s30, %s42
      %s44 = ssub.s32 %s31, %s38
      %s45 = sor.u32 %s43, %s44
      %p46 = scmp.eq.s32.totalorder %s45, 0
      %s48 = sadd.s32 %s47, 1
      %s49 = scalar_select %p46, %s47, %s48
      %p52 = pneg %p46
      %p53 = scmp.eq.s32.totalorder %s23, 1
      %p54 = por %p52, %p53
      %p55 = scmp.ne.s32.totalorder %s47, %s50
      %p56 = scmp.eq.s32.totalorder %s23, 0
      %p57 = por %p55, %p56
      %p58 = scmp.ne.s32.totalorder %s47, %s50
      %p59 = scmp.eq.s32.totalorder %s28, 1
      %p60 = por %p58, %p59
      %p61 = scmp.ne.s32.totalorder %s50, %s51
      %p62 = scmp.eq.s32.totalorder %s28, 0
      %p63 = por %p61, %p62
      %p64 = scmp.ne.s32.totalorder %s50, %s51
      %p65 = scmp.eq.s32.totalorder %s29, 1
      %p66 = por %p64, %p65
      %p68 = scmp.ne.s32.totalorder %s51, %s67
      %p69 = scmp.eq.s32.totalorder %s29, 0
      %p70 = por %p68, %p69
      %s71 = ssub.s32 %s30, %s42
      %p72 = scmp.eq.s32.totalorder %s71, 0
      %s74 = sadd.s32 %s73, 1
      %s75 = scalar_select %p72, %s73, %s74
      %p78 = pneg %p72
      %p79 = scmp.eq.s32.totalorder %s23, 1
      %p80 = por %p78, %p79
      %p81 = scmp.ne.s32.totalorder %s73, %s76
      %p82 = scmp.eq.s32.totalorder %s23, 0
      %p83 = por %p81, %p82
      %p84 = scmp.ne.s32.totalorder %s73, %s76
      %p85 = scmp.eq.s32.totalorder %s28, 1
      %p86 = por %p84, %p85
      %p87 = scmp.ne.s32.totalorder %s76, %s77
      %p88 = scmp.eq.s32.totalorder %s28, 0
      %p89 = por %p87, %p88
      %p90 = scmp.ne.s32.totalorder %s76, %s77
      %p91 = scmp.eq.s32.totalorder %s29, 1
      %p92 = por %p90, %p91
      %p94 = scmp.ne.s32.totalorder %s77, %s93
      %p95 = scmp.eq.s32.totalorder %s29, 0
      %p96 = por %p94, %p95
      %s97 = ssub.s32 %s30, %s42
      %p98 = scmp.eq.s32.totalorder %s97, 0
      %s100 = sadd.s32 %s99, 1
      %s101 = scalar_select %p98, %s99, %s100
      %p104 = pneg %p98
      %p105 = scmp.eq.s32.totalorder %s23, 1
      %p106 = por %p104, %p105
      %p107 = scmp.ne.s32.totalorder %s99, %s102
      %p108 = scmp.eq.s32.totalorder %s23, 0
      %p109 = por %p107, %p108
      %p110 = scmp.ne.s32.totalorder %s99, %s102
      %p111 = scmp.eq.s32.totalorder %s28, 1
      %p112 = por %p110, %p111
      %p113 = scmp.ne.s32.totalorder %s102, %s103
      %p114 = scmp.eq.s32.totalorder %s28, 0
      %p115 = por %p113, %p114
      %p116 = scmp.ne.s32.totalorder %s102, %s103
      %p117 = scmp.eq.s32.totalorder %s29, 1
      %p118 = por %p116, %p117
      %p120 = scmp.ne.s32.totalorder %s103, %s119
      %p121 = scmp.eq.s32.totalorder %s29, 0
      %p122 = por %p120, %p121
      %s123 = ssub.s32 %s30, %s42
      %s124 = ssub.s32 %s31, %s38
      %s125 = sor.u32 %s123, %s124
      %p126 = scmp.eq.s32.totalorder %s125, 0
      %s128 = sadd.s32 %s127, 1
      %s129 = scalar_select %p126, %s127, %s128
      %p132 = pneg %p126
      %p133 = scmp.eq.s32.totalorder %s23, 1
      %p134 = por %p132, %p133
      %p135 = scmp.ne.s32.totalorder %s127, %s130
      %p136 = scmp.eq.s32.totalorder %s23, 0
      %p137 = por %p135, %p136
      %p138 = scmp.ne.s32.totalorder %s127, %s130
      %p139 = scmp.eq.s32.totalorder %s28, 1
      %p140 = por %p138, %p139
      %p141 = scmp.ne.s32.totalorder %s130, %s131
      %p142 = scmp.eq.s32.totalorder %s28, 0
      %p143 = por %p141, %p142
      %p144 = scmp.ne.s32.totalorder %s130, %s131
      %p145 = scmp.eq.s32.totalorder %s29, 1
      %p146 = por %p144, %p145
      %p148 = scmp.ne.s32.totalorder %s131, %s147
      %p149 = scmp.eq.s32.totalorder %s29, 0
      %p150 = por %p148, %p149
      %s151 = ssub.s32 %s30, %s42
      %s152 = ssub.s32 %s31, %s38
      %s153 = sor.u32 %s151, %s152
      %p154 = scmp.eq.s32.totalorder %s153, 0
      %s156 = sadd.s32 %s155, 1
      %s157 = scalar_select %p154, %s155, %s156
      %p160 = pneg %p154
      %p161 = scmp.eq.s32.totalorder %s23, 1
      %p162 = por %p160, %p161
      %p163 = scmp.ne.s32.totalorder %s155, %s158
      %p164 = scmp.eq.s32.totalorder %s23, 0
      %p165 = por %p163, %p164
      %p166 = scmp.ne.s32.totalorder %s155, %s158
      %p167 = scmp.eq.s32.totalorder %s28, 1
      %p168 = por %p166, %p167
      %p169 = scmp.ne.s32.totalorder %s158, %s159
      %p170 = scmp.eq.s32.totalorder %s28, 0
      %p171 = por %p169, %p170
      %p172 = scmp.ne.s32.totalorder %s158, %s159
      %p173 = scmp.eq.s32.totalorder %s29, 1
      %p174 = por %p172, %p173
      %p176 = scmp.ne.s32.totalorder %s159, %s175
      %p177 = scmp.eq.s32.totalorder %s29, 0
      %p178 = por %p176, %p177
      %p179 = scmp.le.s32.totalorder 1, %s23
      %p180 = scmp.lt.s32.totalorder %s23, 3
      %p181 = pnand %p179, %p180
      %p182 = pneg %p181
      // Predicated region
      $region9: #{tpu_custom_call.1} parent=5 // pred_check
        _
      $region10: #{tpu_custom_call.1} parent=5 // pred_check_branch
        %184 = sbr.rel (%p181) target = $region12
      $region11: #{tpu_custom_call.1} parent=5 // pred_region
        %s185 = ssub.s32 %s23, 1
      $region12: #{tpu_custom_call.1} parent=5 // pred_fallthru
        _
      %p186 = scmp.lt.s32.totalorder %s23, 2
      // Predicated region
      $region13: #{tpu_custom_call.1} parent=5 // pred_check
        %p187 = pneg %p186
      $region14: #{tpu_custom_call.1} parent=5 // pred_check_branch
        %189 = sbr.rel (%p187) target = $region16
      $region15: #{tpu_custom_call.1} parent=5 // pred_region
        // Predicated region
        $region17: #{tpu_custom_call.1} parent=15 // pred_check
          %p190 = pneg %p57
        $region18: #{tpu_custom_call.1} parent=15 // pred_check_branch
          %192 = sbr.rel (%p190) target = $region20
        $region19: #{tpu_custom_call.1} parent=15 // pred_region
          %s193 = sand.u32 %s47, 1
          %s194 = scalar_lea.sflag [#allocation3], %s193
          %s195 = sand.u32 %s47, 1
          %s196 = smul.addr %s195, 8
          %s197 = scalar_lea.vmem [#allocation2], %s196
          %s199 = ssub.s32 128, 128
          %200 = vsyncadd %s194, %s199
          %s201 = sadd.s32 %s31, %s30
          %s202 = smul.addr %s201, 128
          %s203 = scalar_lea.hbm %s0, %s202
          %s205 = sshll.u32 %s197, 4
          %s206 = int_to_ptr.vmem [resolvable:$true] %s205
          %208 = dma.hbm_to_vmem [thread:$0]  %s203, 128, %s206, %s194
        $region20: #{tpu_custom_call.1} parent=15 // pred_fallthru
          _
        // Predicated region
        $region21: #{tpu_custom_call.1} parent=15 // pred_check
          %p209 = pneg %p83
        $region22: #{tpu_custom_call.1} parent=15 // pred_check_branch
          %211 = sbr.rel (%p209) target = $region24
        $region23: #{tpu_custom_call.1} parent=15 // pred_region
          %s212 = sand.u32 %s23, 1
          %s213 = scalar_lea.sflag [#allocation6], %s212
          %s214 = sand.u32 %s73, 1
          %s215 = smul.addr %s214, 8
          %s216 = scalar_lea.vmem [#allocation5], %s215
          %s218 = ssub.s32 128, 128
          %219 = vsyncadd %s213, %s218
          %s220 = smul.addr %s30, 128
          %s221 = scalar_lea.hbm %s1, %s220
          %s223 = sshll.u32 %s216, 4
          %s224 = int_to_ptr.vmem [resolvable:$true] %s223
          %226 = dma.hbm_to_vmem [thread:$0]  %s221, 128, %s224, %s213
        $region24: #{tpu_custom_call.1} parent=15 // pred_fallthru
          _
        // Predicated region
        $region25: #{tpu_custom_call.1} parent=15 // pred_check
          %p227 = pneg %p109
        $region26: #{tpu_custom_call.1} parent=15 // pred_check_branch
          %229 = sbr.rel (%p227) target = $region28
        $region27: #{tpu_custom_call.1} parent=15 // pred_region
          %s230 = sand.u32 %s23, 1
          %s231 = scalar_lea.sflag [#allocation6], %s230
          %s232 = sand.u32 %s99, 1
          %s233 = smul.addr %s232, 8
          %s234 = scalar_lea.vmem [#allocation7], %s233
          %s236 = ssub.s32 128, 128
          %237 = vsyncadd %s231, %s236
          %s238 = smul.addr %s30, 128
          %s239 = scalar_lea.hbm %s2, %s238
          %s241 = sshll.u32 %s234, 4
          %s242 = int_to_ptr.vmem [resolvable:$true] %s241
          %244 = dma.hbm_to_vmem [thread:$0]  %s239, 128, %s242, %s231
        $region28: #{tpu_custom_call.1} parent=15 // pred_fallthru
          _
      $region16: #{tpu_custom_call.1} parent=5 // pred_fallthru
        _
      %p245 = scmp.le.s32.totalorder 1, %s23
      %p246 = scmp.lt.s32.totalorder %s23, 3
      %p247 = pnand %p245, %p246
      %p248 = pneg %p247
      // Predicated region
      $region29: #{tpu_custom_call.1} parent=5 // pred_check
        _
      $region30: #{tpu_custom_call.1} parent=5 // pred_check_branch
        %250 = sbr.rel (%p247) target = $region32
      $region31: #{tpu_custom_call.1} parent=5 // pred_region
        %s251 = ssub.s32 %s23, 1
        %s252 = sand.u32 %s50, 1
        %s253 = scalar_lea.sflag [#allocation3], %s252
        %s254 = sand.u32 %s50, 1
        %s255 = smul.addr %s254, 8
        %s256 = scalar_lea.vmem [#allocation2], %s255
        // Predicated region
        $region33: #{tpu_custom_call.1} parent=31 // pred_check
          %p257 = pneg %p63
        $region34: #{tpu_custom_call.1} parent=31 // pred_check_branch
          %259 = sbr.rel (%p257) target = $region36
        $region35: #{tpu_custom_call.1} parent=31 // pred_region
          %260 = dma.done %s253, 128
        $region36: #{tpu_custom_call.1} parent=31 // pred_fallthru
          _
        %s261 = sand.u32 %s28, 1
        %s262 = scalar_lea.sflag [#allocation6], %s261
        %s263 = sand.u32 %s76, 1
        %s264 = smul.addr %s263, 8
        %s265 = scalar_lea.vmem [#allocation5], %s264
        // Predicated region
        $region37: #{tpu_custom_call.1} parent=31 // pred_check
          %p266 = pneg %p89
        $region38: #{tpu_custom_call.1} parent=31 // pred_check_branch
          %268 = sbr.rel (%p266) target = $region40
        $region39: #{tpu_custom_call.1} parent=31 // pred_region
          %269 = dma.done %s262, 128
        $region40: #{tpu_custom_call.1} parent=31 // pred_fallthru
          _
        %s270 = sand.u32 %s28, 1
        %s271 = scalar_lea.sflag [#allocation6], %s270
        %s272 = sand.u32 %s102, 1
        %s273 = smul.addr %s272, 8
        %s274 = scalar_lea.vmem [#allocation7], %s273
        // Predicated region
        $region41: #{tpu_custom_call.1} parent=31 // pred_check
          %p275 = pneg %p115
        $region42: #{tpu_custom_call.1} parent=31 // pred_check_branch
          %277 = sbr.rel (%p275) target = $region44
        $region43: #{tpu_custom_call.1} parent=31 // pred_region
          %278 = dma.done %s271, 128
        $region44: #{tpu_custom_call.1} parent=31 // pred_fallthru
          _
        %s279 = sand.u32 %s50, 1
        %s280 = scalar_lea.sflag [#allocation3], %s279
        %s281 = sand.u32 %s50, 1
        %s282 = smul.addr %s281, 8
        %s283 = scalar_lea.vmem [#allocation2], %s282
        %p284 = pneg %p63
        %p285 = pneg %p60
        %s286 = sand.u32 %s28, 1
        %s287 = scalar_lea.sflag [#allocation6], %s286
        %s288 = sand.u32 %s76, 1
        %s289 = smul.addr %s288, 8
        %s290 = scalar_lea.vmem [#allocation5], %s289
        %p291 = pneg %p89
        %p292 = pneg %p86
        %s293 = sand.u32 %s28, 1
        %s294 = scalar_lea.sflag [#allocation6], %s293
        %s295 = sand.u32 %s102, 1
        %s296 = smul.addr %s295, 8
        %s297 = scalar_lea.vmem [#allocation7], %s296
        %p298 = pneg %p115
        %p299 = pneg %p112
        %p300 = pneg %p143
        %p301 = pneg %p140
        %s302 = sand.u32 %s130, 1
        %s303 = scalar_lea.sflag [#allocation4], %s302
        %s304 = sand.u32 %s130, 1
        %s305 = smul.addr %s304, 8
        %s306 = scalar_lea.vmem [#allocation8], %s305
        %p307 = pneg %p171
        %p308 = pneg %p168
        %s309 = sand.u32 %s158, 1
        %s310 = scalar_lea.sflag [#allocation10], %s309
        %s311 = sand.u32 %s158, 1
        %s312 = smul.addr %s311, 8
        %s313 = scalar_lea.vmem [#allocation9], %s312
        %v314 = vld [vmem:[%s256] sm:$0xff]
        %v315 = vmul.f32 %v314, 0.17677669
        %v316 = vld [vmem:[%s265] sm:$0xff]
        %vm317 = vcmask 261120
        %v319 = vsel %vm317, %v315, 0
        %v322 = vsel %vm317, %v316, 0
        %324 = vmatprep.subr.mxu0 0.0
        %325 = vmatpush1.xpose.msra.mxu0 %v322
        %326 = vmatprep.subr.mxu0 0.0
        %327 = vmatpush1.xpose.msra.mxu0 0.0
        %328 = vmatprep.subr.mxu0 0.0
        %329 = vmatpush1.xpose.msra.mxu0 0.0
        %330 = vmatprep.subr.mxu0 0.0
        %331 = vmatpush1.xpose.msra.mxu0 0.0
        %332 = vmatprep.subr.mxu0 0.0
        %333 = vmatpush1.xpose.msra.mxu0 0.0
        %334 = vmatprep.subr.mxu0 0.0
        %335 = vmatpush1.xpose.msra.mxu0 0.0
        %336 = vmatprep.subr.mxu0 0.0
        %337 = vmatpush1.xpose.msra.mxu0 0.0
        %338 = vmatprep.subr.mxu0 0.0
        %339 = vmatpush1.xpose.msra.mxu0 0.0
        %340 = vmatprep.subr.mxu0 0.0
        %341 = vmatpush1.xpose.msra.mxu0 0.0
        %342 = vmatprep.subr.mxu0 0.0
        %343 = vmatpush1.xpose.msra.mxu0 0.0
        %344 = vmatprep.subr.mxu0 0.0
        %345 = vmatpush1.xpose.msra.mxu0 0.0
        %346 = vmatprep.subr.mxu0 0.0
        %347 = vmatpush1.xpose.msra.mxu0 0.0
        %348 = vmatprep.subr.mxu0 0.0
        %349 = vmatpush1.xpose.msra.mxu0 0.0
        %350 = vmatprep.subr.mxu0 0.0
        %351 = vmatpush1.xpose.msra.mxu0 0.0
        %352 = vmatprep.subr.mxu0 0.0
        %353 = vmatpush1.xpose.msra.mxu0 0.0
        %354 = vmatprep.subr.mxu0 0.0
        %355 = vmatpush1.xpose.msra.mxu0 0.0
        %356 = vmatprep.subr.mxu0 0.0
        %357 = vmatpush1.xpose.msra.mxu0 0.0
        %358 = vmatprep.subr.mxu0 0.0
        %359 = vmatpush1.xpose.msra.mxu0 0.0
        %360 = vmatprep.subr.mxu0 0.0
        %361 = vmatpush1.xpose.msra.mxu0 0.0
        %362 = vmatprep.subr.mxu0 0.0
        %363 = vmatpush1.xpose.msra.mxu0 0.0
        %364 = vmatprep.subr.mxu0 0.0
        %365 = vmatpush1.xpose.msra.mxu0 0.0
        %366 = vmatprep.subr.mxu0 0.0
        %367 = vmatpush1.xpose.msra.mxu0 0.0
        %368 = vmatprep.subr.mxu0 0.0
        %369 = vmatpush1.xpose.msra.mxu0 0.0
        %370 = vmatprep.subr.mxu0 0.0
        %371 = vmatpush1.xpose.msra.mxu0 0.0
        %372 = vmatprep.subr.mxu0 0.0
        %373 = vmatpush1.xpose.msra.mxu0 0.0
        %374 = vmatprep.subr.mxu0 0.0
        %375 = vmatpush1.xpose.msra.mxu0 0.0
        %376 = vmatprep.subr.mxu0 0.0
        %377 = vmatpush1.xpose.msra.mxu0 0.0
        %378 = vmatprep.subr.mxu0 0.0
        %379 = vmatpush1.xpose.msra.mxu0 0.0
        %380 = vmatprep.subr.mxu0 0.0
        %381 = vmatpush1.xpose.msra.mxu0 0.0
        %382 = vmatprep.subr.mxu0 0.0
        %383 = vmatpush1.xpose.msra.mxu0 0.0
        %384 = vmatprep.subr.mxu0 0.0
        %385 = vmatpush1.xpose.msra.mxu0 0.0
        %386 = vmatprep.subr.mxu0 0.0
        %387 = vmatpush1.xpose.msra.mxu0 0.0
        %388 = vmatprep.mubr.f32.mxu0 0.0
        %389 = vmatmul.mubr.f32.gmra.mrb[0].mxu0 %v319
        %v390 = vpop.f32.mrb[0].mxu0
        %v391 = vadd.f32 0.0, %v390
        %v392 = vpop.f32.mrb[0].mxu0
        %393 = vdwg.mxu0
        %vm394 = vcmask 64512
        %v395 = vsel %vm394, %v391, -inf
        %396 = vmax.xlane.f32.xlu0 %v395
        %v397 = vpop.xlane.xlu0 %396
        %v398 = vsub.f32 %v391, %v397
        %v399 = vmul.f32 %v398, 1.442695
        %v400 = vpow.pop %v399
        %v401 = vsel %vm394, %v400, 0.0
        %402 = vadd.xlane.f32.xlu0 %v401
        %v403 = vpop.xlane.xlu0 %402
        %v404 = vrcp.pop %v403
        %v405 = vmul.f32 1.0, %v404
        %v406 = vld [vmem:[%s274] sm:$0xff]
        %v408 = vsel %vm394, %v400, 0
        %410 = vmatprep.subr.mxu0 0.0
        %411 = vmatpush1.msra.mxu0 %v406
        %412 = vmatprep.subr.mxu0 0.0
        %413 = vmatpush1.msra.mxu0 0.0
        %414 = vmatprep.subr.mxu0 0.0
        %415 = vmatpush1.msra.mxu0 0.0
        %416 = vmatprep.subr.mxu0 0.0
        %417 = vmatpush1.msra.mxu0 0.0
        %418 = vmatprep.subr.mxu0 0.0
        %419 = vmatpush1.msra.mxu0 0.0
        %420 = vmatprep.subr.mxu0 0.0
        %421 = vmatpush1.msra.mxu0 0.0
        %422 = vmatprep.subr.mxu0 0.0
        %423 = vmatpush1.msra.mxu0 0.0
        %424 = vmatprep.subr.mxu0 0.0
        %425 = vmatpush1.msra.mxu0 0.0
        %426 = vmatprep.subr.mxu0 0.0
        %427 = vmatpush1.msra.mxu0 0.0
        %428 = vmatprep.subr.mxu0 0.0
        %429 = vmatpush1.msra.mxu0 0.0
        %430 = vmatprep.subr.mxu0 0.0
        %431 = vmatpush1.msra.mxu0 0.0
        %432 = vmatprep.subr.mxu0 0.0
        %433 = vmatpush1.msra.mxu0 0.0
        %434 = vmatprep.subr.mxu0 0.0
        %435 = vmatpush1.msra.mxu0 0.0
        %436 = vmatprep.subr.mxu0 0.0
        %437 = vmatpush1.msra.mxu0 0.0
        %438 = vmatprep.subr.mxu0 0.0
        %439 = vmatpush1.msra.mxu0 0.0
        %440 = vmatprep.subr.mxu0 0.0
        %441 = vmatpush1.msra.mxu0 0.0
        %442 = vmatprep.subr.mxu0 0.0
        %443 = vmatpush1.msra.mxu0 0.0
        %444 = vmatprep.subr.mxu0 0.0
        %445 = vmatpush1.msra.mxu0 0.0
        %446 = vmatprep.subr.mxu0 0.0
        %447 = vmatpush1.msra.mxu0 0.0
        %448 = vmatprep.subr.mxu0 0.0
        %449 = vmatpush1.msra.mxu0 0.0
        %450 = vmatprep.subr.mxu0 0.0
        %451 = vmatpush1.msra.mxu0 0.0
        %452 = vmatprep.subr.mxu0 0.0
        %453 = vmatpush1.msra.mxu0 0.0
        %454 = vmatprep.subr.mxu0 0.0
        %455 = vmatpush1.msra.mxu0 0.0
        %456 = vmatprep.subr.mxu0 0.0
        %457 = vmatpush1.msra.mxu0 0.0
        %458 = vmatprep.subr.mxu0 0.0
        %459 = vmatpush1.msra.mxu0 0.0
        %460 = vmatprep.subr.mxu0 0.0
        %461 = vmatpush1.msra.mxu0 0.0
        %462 = vmatprep.subr.mxu0 0.0
        %463 = vmatpush1.msra.mxu0 0.0
        %464 = vmatprep.subr.mxu0 0.0
        %465 = vmatpush1.msra.mxu0 0.0
        %466 = vmatprep.subr.mxu0 0.0
        %467 = vmatpush1.msra.mxu0 0.0
        %468 = vmatprep.subr.mxu0 0.0
        %469 = vmatpush1.msra.mxu0 0.0
        %470 = vmatprep.subr.mxu0 0.0
        %471 = vmatpush1.msra.mxu0 0.0
        %472 = vmatprep.subr.mxu0 0.0
        %473 = vmatpush1.msra.mxu0 0.0
        %474 = vmatprep.mubr.f32.mxu0 0.0
        %475 = vmatmul.mubr.f32.gmra.mrb[0].mxu0 %v408
        %v476 = vpop.f32.mrb[0].mxu0
        %v477 = vadd.f32 0.0, %v476
        %v478 = vpop.f32.mrb[0].mxu0
        %479 = vdwg.mxu0
        %v480 = vmul.f32 %v477, %v405
        %481 = vst.msk [vmem:[%s306] sm:$0xff] %vm317, %v480
        %v482 = vmul.f32 %v400, %v405
        %483 = vst.msk [vmem:[%s313] sm:$0xff] %vm394, %v482
        %s484 = sand.u32 %s130, 1
        %s485 = scalar_lea.sflag [#allocation4], %s484
        %s486 = sand.u32 %s130, 1
        %s487 = smul.addr %s486, 8
        %s488 = scalar_lea.vmem [#allocation8], %s487
        %s489 = sand.u32 %s158, 1
        %s490 = scalar_lea.sflag [#allocation10], %s489
        %s491 = sand.u32 %s158, 1
        %s492 = smul.addr %s491, 8
        %s493 = scalar_lea.vmem [#allocation9], %s492
        // Predicated region
        $region45: #{tpu_custom_call.1} parent=31 // pred_check
          %p494 = pneg %p140
        $region46: #{tpu_custom_call.1} parent=31 // pred_check_branch
          %496 = sbr.rel (%p494) target = $region48
        $region47: #{tpu_custom_call.1} parent=31 // pred_region
          %s498 = ssub.s32 128, 128
          %499 = vsyncadd %s485, %s498
          %s500 = sadd.s32 %s33, %s32
          %s501 = smul.addr %s500, 128
          %s502 = scalar_lea.hbm %s3, %s501
          %s504 = sshll.u32 %s488, 4
          %s505 = int_to_ptr.vmem [resolvable:$true] %s504
          %507 = dma.vmem_to_hbm [thread:$0]  %s505, 128, %s502, %s485
        $region48: #{tpu_custom_call.1} parent=31 // pred_fallthru
          _
        // Predicated region
        $region49: #{tpu_custom_call.1} parent=31 // pred_check
          %p508 = pneg %p168
        $region50: #{tpu_custom_call.1} parent=31 // pred_check_branch
          %510 = sbr.rel (%p508) target = $region52
        $region51: #{tpu_custom_call.1} parent=31 // pred_region
          %s512 = ssub.s32 128, 128
          %513 = vsyncadd %s490, %s512
          %s514 = sadd.s32 %s33, %s32
          %s515 = smul.addr %s514, 128
          %s516 = scalar_lea.hbm %s4, %s515
          %s518 = sshll.u32 %s493, 4
          %s519 = int_to_ptr.vmem [resolvable:$true] %s518
          %521 = dma.vmem_to_hbm [thread:$0]  %s519, 128, %s516, %s490
        $region52: #{tpu_custom_call.1} parent=31 // pred_fallthru
          _
      $region32: #{tpu_custom_call.1} parent=5 // pred_fallthru
        _
      %p522 = scmp.le.s32.totalorder 2, %s23
      // Predicated region
      $region53: #{tpu_custom_call.1} parent=5 // pred_check
        %p523 = pneg %p522
      $region54: #{tpu_custom_call.1} parent=5 // pred_check_branch
        %525 = sbr.rel (%p523) target = $region56
      $region55: #{tpu_custom_call.1} parent=5 // pred_region
        %s526 = ssub.s32 %s23, 2
        // Predicated region
        $region57: #{tpu_custom_call.1} parent=55 // pred_check
          %p527 = pneg %p146
        $region58: #{tpu_custom_call.1} parent=55 // pred_check_branch
          %529 = sbr.rel (%p527) target = $region60
        $region59: #{tpu_custom_call.1} parent=55 // pred_region
          %s530 = sand.u32 %s131, 1
          %s531 = scalar_lea.sflag [#allocation4], %s530
          %s532 = sand.u32 %s131, 1
          %s533 = smul.addr %s532, 8
          %s534 = scalar_lea.vmem [#allocation8], %s533
          %535 = dma.done %s531, 128
        $region60: #{tpu_custom_call.1} parent=55 // pred_fallthru
          _
        // Predicated region
        $region61: #{tpu_custom_call.1} parent=55 // pred_check
          %p536 = pneg %p174
        $region62: #{tpu_custom_call.1} parent=55 // pred_check_branch
          %538 = sbr.rel (%p536) target = $region64
        $region63: #{tpu_custom_call.1} parent=55 // pred_region
          %s539 = sand.u32 %s159, 1
          %s540 = scalar_lea.sflag [#allocation10], %s539
          %s541 = sand.u32 %s159, 1
          %s542 = smul.addr %s541, 8
          %s543 = scalar_lea.vmem [#allocation9], %s542
          %544 = dma.done %s540, 128
        $region64: #{tpu_custom_call.1} parent=55 // pred_fallthru
          _
      $region56: #{tpu_custom_call.1} parent=5 // pred_fallthru
        _
    $region6: #{tpu_custom_call.1} parent=1 // loop_footer
      %s27 = sadd.s32 1, %s23
    $region7: #{tpu_custom_call.1} parent=1 // loop_footer_branch
      %22 = sbr.rel target = $region3
    $region8: #{tpu_custom_call.1} parent=1 // loop_exit
      _
    %545 = vsyncpa [#allocation3], 1
    %s546 = scalar_lea.sflag [#allocation3], 1
    %547 = vsyncpa %s546, 1
    %548 = vsyncpa [#allocation6], 1
    %s549 = scalar_lea.sflag [#allocation6], 1
    %550 = vsyncpa %s549, 1
    %551 = vsyncpa [#allocation4], 1
    %s552 = scalar_lea.sflag [#allocation4], 1
    %553 = vsyncpa %s552, 1
    %554 = vsyncpa [#allocation10], 1
    %s555 = scalar_lea.sflag [#allocation10], 1
    %556 = vsyncpa %s555, 1

</llo_original>
